<compile_context>
chip_gen: v7x
topology: tpu7x:2x2x1
jax: 0.10.0
libtpu: 0.0.40
codegen_flags: <defaults>
</compile_context>

<pallas_src>
import numpy as np
import jax
import jax.numpy as jnp
from jax import lax
from jax.experimental import pallas as pl
from jax.experimental.pallas import tpu as pltpu

RESOLUTION = 5.0
THERMAL_CONDUCTIVITY = 1.0
NORM_FACTOR = 1e-16
HP_COEFF = 4200.0 * 5.0 * 0.00024 / (RESOLUTION ** 3)  # c_p * dT * flow / res^3

# Deterministic synthetic NormalizeTransform statistics (info.yaml is not
# available in-script): x_unnormed = x_normed * std + mean.
P_STD, P_MEAN = 1.0e5, 9.0e5      # Liquid Pressure [Pa]
V_STD = 1.0e-3                    # Liquid X/Y-Velocity
T_STD, T_MEAN = 5.0, 12.0         # Temperature [C]


# ---------------------------------------------------------------------------
# Surrogate equations of state (shared by kernel and reference).
# TODO(synk): exact bodies of eos_water_density_IFC67 / eos_water_enthalphy
# were not provided with the module; deterministic smooth surrogates are used.
# ---------------------------------------------------------------------------
def _surrogate_eos(T, p):
    dT = T - 20.0
    density = (1000.0 * (1.0 - 2.1e-4 * dT - 3.0e-6 * dT * dT)
               * (1.0 + 4.6e-10 * (p - 1.0e5)))
    molar_density = density * (1.0 / 0.018015)
    enthalpy = 75.4 * T + 1.8e-5 * (p - 1.0e5)
    return density, molar_density, enthalpy


# ---------------------------------------------------------------------------
# In-kernel stencil helpers (pure VPU / shift work; no MXU, no operator mats).
# ---------------------------------------------------------------------------
def _shift_zero(x, shift, axis):
    """result[..., i, ...] = x[..., i - shift, ...]; zero where out of range."""
    n = x.shape[axis]
    zshape = list(x.shape)
    zshape[axis] = 1
    zeros = jnp.zeros(zshape, x.dtype)
    if shift > 0:
        body = lax.slice_in_dim(x, 0, n - 1, axis=axis)
        return jnp.concatenate([zeros, body], axis=axis)
    else:
        body = lax.slice_in_dim(x, 1, n, axis=axis)
        return jnp.concatenate([body, zeros], axis=axis)


def _gradient(x, axis):
    """torch.gradient along `axis`: central diff, one-sided edges, spacing 1."""
    n = x.shape[axis]
    xp = _shift_zero(x, -1, axis)   # x[i + 1]   (zero past the end)
    xm = _shift_zero(x, +1, axis)   # x[i - 1]   (zero before the start)
    idx = lax.broadcasted_iota(jnp.int32, x.shape, axis)
    central = 0.5 * (xp - xm)
    return jnp.where(idx == 0, xp - x, jnp.where(idx == n - 1, x - xm, central))


def _conv3x3_fixed(x):
    """conv2d(x, [[-1,0,1],[0,0,0],[1,0,-1]], padding=1) on (Bt, H, W)."""
    # d[i, j] = x[i, j+1] - x[i, j-1]   (zero-padded at the column edges)
    d = _shift_zero(x, -1, 2) - _shift_zero(x, +1, 2)
    # out[i, j] = d[i-1, j] - d[i+1, j] (zero-padded at the row edges)
    return _shift_zero(d, +1, 1) - _shift_zero(d, -1, 1)


def _energy_residual(inp, pred):
    """inp: (Bt, 4, H, W) normalized inputs; pred: (Bt, 1, H, W) normalized T."""
    # Fused NormalizeTransform.reverse (de-normalization) on the VPU.
    pressure = inp[:, 0] * P_STD + P_MEAN
    vx = inp[:, 1] * V_STD
    vy = inp[:, 2] * V_STD
    ids = inp[:, 3]                     # Material ID stays normalized
    T = pred[:, 0] * T_STD + T_MEAN     # (Bt, H, W)

    density, molar_density, enthalpy = _surrogate_eos(T, pressure)
    inv_res = 1.0 / RESOLUTION

    tg0 = _gradient(T, 1)
    tg1 = _gradient(T, 2)
    flux_u = molar_density * vx * enthalpy - THERMAL_CONDUCTIVITY * tg0 * inv_res
    flux_v = molar_density * vy * enthalpy - THERMAL_CONDUCTIVITY * tg1 * inv_res
    energy = _gradient(flux_u, 1) * inv_res + _gradient(flux_v, 2) * inv_res

    inflow = _conv3x3_fixed(HP_COEFF * density * ids)
    return energy - inflow


# ---------------------------------------------------------------------------
# Kernels
# ---------------------------------------------------------------------------
def _sumsq_kernel(inp_ref, pred_ref, sumsq_ref):
    energy = _energy_residual(inp_ref[...], pred_ref[...])
    sumsq_ref[0, 0] = jnp.sum(energy * energy)


def _keepdim_kernel(inp_ref, pred_ref, out_ref):
    energy = _energy_residual(inp_ref[...], pred_ref[...])
    out_ref[...] = (energy * energy) * NORM_FACTOR


# ---------------------------------------------------------------------------
# Wrapper
# ---------------------------------------------------------------------------
def _pick_batch_tile(B, H, W, budget_bytes=2 << 20):
    """Largest divisor of B whose field blocks stay under ~budget_bytes."""
    slab_bytes = (4 + 1 + 1) * H * W * 4   # inputs + prediction + output, f32
    cap = max(1, budget_bytes // slab_bytes)
    bt = 1
    for d in range(1, B + 1):
        if B % d == 0 and d <= cap:
            bt = d
    return bt


def energy_loss_pallas(prediction_normed, inputs_normed, keep_dim=False):
    B, C, H, W = inputs_normed.shape
    assert C == 4 and prediction_normed.shape == (B, 1, H, W)
    inputs_normed = inputs_normed.astype(jnp.float32)
    prediction_normed = prediction_normed.astype(jnp.float32)

    Bt = _pick_batch_tile(B, H, W)
    grid = (B // Bt,)

    in_specs = [
        pl.BlockSpec((Bt, 4, H, W), lambda b: (b, 0, 0, 0)),
        pl.BlockSpec((Bt, 1, H, W), lambda b: (b, 0, 0, 0)),
    ]
    compiler_params = pltpu.CompilerParams(
        dimension_semantics=("parallel",),        # batch slabs are independent
        vmem_limit_bytes=32 * 1024 * 1024,
    )

    if keep_dim:
        # torch.nn.MSELoss(reduction='none')(energy, 0) * norm_factor
        return pl.pallas_call(
            _keepdim_kernel,
            out_shape=jax.ShapeDtypeStruct((B, H, W), jnp.float32),
            grid_spec=pltpu.PrefetchScalarGridSpec(
                num_scalar_prefetch=0,
                grid=grid,
                in_specs=in_specs,
                out_specs=pl.BlockSpec((Bt, H, W), lambda b: (b, 0, 0)),
            ),
            compiler_params=compiler_params,
        )(inputs_normed, prediction_normed)

    # Default path: only per-grid-step sum-of-squares partials leave the kernel.
    partials = pl.pallas_call(
        _sumsq_kernel,
        out_shape=jax.ShapeDtypeStruct((grid[0], 1), jnp.float32),
        grid_spec=pltpu.PrefetchScalarGridSpec(
            num_scalar_prefetch=0,
            grid=grid,
            in_specs=in_specs,
            out_specs=pl.BlockSpec((1, 1), lambda b: (b, 0),
                                   memory_space=pltpu.MemorySpace.SMEM),
        ),
        compiler_params=compiler_params,
    )(inputs_normed, prediction_normed)

    # torch.nn.MSELoss()(energy, 0) * norm_factor
    return jnp.sum(partials) / (B * H * W) * NORM_FACTOR


# ---------------------------------------------------------------------------
# Pure-JAX reference (mirrors the PyTorch forward) for correctness checks.
# ---------------------------------------------------------------------------
def _ref_conv3x3(x):
    xp = jnp.pad(x, ((0, 0), (1, 1), (1, 1)))
    return (-xp[:, :-2, :-2] + xp[:, :-2, 2:] + xp[:, 2:, :-2] - xp[:, 2:, 2:])


def _ref_energy(prediction_normed, inputs_normed):
    pressure = inputs_normed[:, 0] * P_STD + P_MEAN
    vx = inputs_normed[:, 1] * V_STD
    vy = inputs_normed[:, 2] * V_STD
    ids = inputs_normed[:, 3]
    T = jnp.squeeze(prediction_normed, axis=1) * T_STD + T_MEAN

    density, molar_density, enthalpy = _surrogate_eos(T, pressure)
    tg0 = jnp.gradient(T, axis=1)
    tg1 = jnp.gradient(T, axis=2)
    flux_u = molar_density * vx * enthalpy - THERMAL_CONDUCTIVITY * tg0 / RESOLUTION
    flux_v = molar_density * vy * enthalpy - THERMAL_CONDUCTIVITY * tg1 / RESOLUTION
    eu = jnp.gradient(flux_u, axis=1) / RESOLUTION
    ev = jnp.gradient(flux_v, axis=2) / RESOLUTION
    return eu + ev - _ref_conv3x3(HP_COEFF * density * ids)


if __name__ == "__main__":
    key = jax.random.PRNGKey(0)
    B, C, H, W = 2, 4, 16, 16
    k1, k2 = jax.random.split(key)
    inputs = jax.random.normal(k1, (B, C, H, W), dtype=jnp.float32)
    prediction = jax.random.normal(k2, (B, 1, H, W), dtype=jnp.float32)

    energy_ref = _ref_energy(prediction, inputs)

    # keep_dim=False (default): scalar MSE * norm_factor
    loss = jax.block_until_ready(energy_loss_pallas(prediction, inputs, keep_dim=False))
    ref_loss = jnp.mean(energy_ref * energy_ref) * NORM_FACTOR
    np.testing.assert_allclose(np.asarray(loss), np.asarray(ref_loss), rtol=1e-2)

    # keep_dim=True: per-element energy^2 * norm_factor
    loss_map = jax.block_until_ready(energy_loss_pallas(prediction, inputs, keep_dim=True))
    ref_map = (energy_ref * energy_ref) * NORM_FACTOR
    np.testing.assert_allclose(np.asarray(loss_map), np.asarray(ref_map),
                               rtol=1e-2, atol=1e-12)

    print("KERNEL_OK")
</pallas_src>

<mosaic_0001>
module attributes {stable_mosaic.version = 11 : i64} {
  func.func @_sumsq_kernel(%arg0: i32, %arg1: memref<2x4x16x16xf32, #tpu.memory_space<vmem>>, %arg2: memref<2x1x16x16xf32, #tpu.memory_space<vmem>>, %arg3: memref<1x1xf32, #tpu.memory_space<smem>>) attributes {dimension_semantics = [#tpu.dimension_semantics<parallel>], iteration_bounds = array<i64: 1>, scalar_prefetch = 0 : i64, scratch_operands = 0 : i64, tpu.core_type = #tpu.core_type<tc>, window_params = [{transform_indices = @transform_0, window_bounds = array<i64: 2, 4, 16, 16>}, {transform_indices = @transform_1, window_bounds = array<i64: 2, 1, 16, 16>}, {transform_indices = @transform_2, window_bounds = array<i64: 1, 1>}]} {
    %c0 = arith.constant 0 : index
    %c0_0 = arith.constant 0 : index
    %c0_1 = arith.constant 0 : index
    %c0_2 = arith.constant 0 : index
    %0 = vector.load %arg1[%c0, %c0_0, %c0_1, %c0_2] : memref<2x4x16x16xf32, #tpu.memory_space<vmem>>, vector<2x4x16x16xf32>
    %c0_3 = arith.constant 0 : index
    %c0_4 = arith.constant 0 : index
    %c0_5 = arith.constant 0 : index
    %c0_6 = arith.constant 0 : index
    %1 = vector.load %arg2[%c0_3, %c0_4, %c0_5, %c0_6] : memref<2x1x16x16xf32, #tpu.memory_space<vmem>>, vector<2x1x16x16xf32>
    %2 = vector.extract_strided_slice %0 {offsets = [0, 0, 0, 0], sizes = [2, 1, 16, 16], strides = [1, 1, 1, 1]} : vector<2x4x16x16xf32> to vector<2x1x16x16xf32>
    %3 = vector.shape_cast %2 : vector<2x1x16x16xf32> to vector<2x16x16xf32>
    %cst = arith.constant 1.000000e+05 : f32
    %4 = vector.broadcast %cst : f32 to vector<2x16x16xf32>
    %5 = arith.mulf %3, %4 : vector<2x16x16xf32>
    %cst_7 = arith.constant 9.000000e+05 : f32
    %6 = vector.broadcast %cst_7 : f32 to vector<2x16x16xf32>
    %7 = arith.addf %5, %6 : vector<2x16x16xf32>
    %8 = vector.extract_strided_slice %0 {offsets = [0, 1, 0, 0], sizes = [2, 1, 16, 16], strides = [1, 1, 1, 1]} : vector<2x4x16x16xf32> to vector<2x1x16x16xf32>
    %9 = vector.shape_cast %8 : vector<2x1x16x16xf32> to vector<2x16x16xf32>
    %cst_8 = arith.constant 1.000000e-03 : f32
    %10 = vector.broadcast %cst_8 : f32 to vector<2x16x16xf32>
    %11 = arith.mulf %9, %10 : vector<2x16x16xf32>
    %12 = vector.extract_strided_slice %0 {offsets = [0, 2, 0, 0], sizes = [2, 1, 16, 16], strides = [1, 1, 1, 1]} : vector<2x4x16x16xf32> to vector<2x1x16x16xf32>
    %13 = vector.shape_cast %12 : vector<2x1x16x16xf32> to vector<2x16x16xf32>
    %cst_9 = arith.constant 1.000000e-03 : f32
    %14 = vector.broadcast %cst_9 : f32 to vector<2x16x16xf32>
    %15 = arith.mulf %13, %14 : vector<2x16x16xf32>
    %16 = vector.extract_strided_slice %0 {offsets = [0, 3, 0, 0], sizes = [2, 1, 16, 16], strides = [1, 1, 1, 1]} : vector<2x4x16x16xf32> to vector<2x1x16x16xf32>
    %17 = vector.shape_cast %16 : vector<2x1x16x16xf32> to vector<2x16x16xf32>
    %18 = vector.shape_cast %1 : vector<2x1x16x16xf32> to vector<2x16x16xf32>
    %cst_10 = arith.constant 5.000000e+00 : f32
    %19 = vector.broadcast %cst_10 : f32 to vector<2x16x16xf32>
    %20 = arith.mulf %18, %19 : vector<2x16x16xf32>
    %cst_11 = arith.constant 1.200000e+01 : f32
    %21 = vector.broadcast %cst_11 : f32 to vector<2x16x16xf32>
    %22 = arith.addf %20, %21 : vector<2x16x16xf32>
    %cst_12 = arith.constant 2.000000e+01 : f32
    %23 = vector.broadcast %cst_12 : f32 to vector<2x16x16xf32>
    %24 = arith.subf %22, %23 : vector<2x16x16xf32>
    %cst_13 = arith.constant 2.100000e-04 : f32
    %25 = vector.broadcast %cst_13 : f32 to vector<2x16x16xf32>
    %26 = arith.mulf %25, %24 : vector<2x16x16xf32>
    %cst_14 = arith.constant 1.000000e+00 : f32
    %27 = vector.broadcast %cst_14 : f32 to vector<2x16x16xf32>
    %28 = arith.subf %27, %26 : vector<2x16x16xf32>
    %cst_15 = arith.constant 3.000000e-06 : f32
    %29 = vector.broadcast %cst_15 : f32 to vector<2x16x16xf32>
    %30 = arith.mulf %29, %24 : vector<2x16x16xf32>
    %31 = arith.mulf %30, %24 : vector<2x16x16xf32>
    %32 = arith.subf %28, %31 : vector<2x16x16xf32>
    %cst_16 = arith.constant 1.000000e+03 : f32
    %33 = vector.broadcast %cst_16 : f32 to vector<2x16x16xf32>
    %34 = arith.mulf %33, %32 : vector<2x16x16xf32>
    %cst_17 = arith.constant 1.000000e+05 : f32
    %35 = vector.broadcast %cst_17 : f32 to vector<2x16x16xf32>
    %36 = arith.subf %7, %35 : vector<2x16x16xf32>
    %cst_18 = arith.constant 4.600000e-10 : f32
    %37 = vector.broadcast %cst_18 : f32 to vector<2x16x16xf32>
    %38 = arith.mulf %37, %36 : vector<2x16x16xf32>
    %cst_19 = arith.constant 1.000000e+00 : f32
    %39 = vector.broadcast %cst_19 : f32 to vector<2x16x16xf32>
    %40 = arith.addf %39, %38 : vector<2x16x16xf32>
    %41 = arith.mulf %34, %40 : vector<2x16x16xf32>
    %cst_20 = arith.constant 55.5092964 : f32
    %42 = vector.broadcast %cst_20 : f32 to vector<2x16x16xf32>
    %43 = arith.mulf %41, %42 : vector<2x16x16xf32>
    %cst_21 = arith.constant 7.540000e+01 : f32
    %44 = vector.broadcast %cst_21 : f32 to vector<2x16x16xf32>
    %45 = arith.mulf %44, %22 : vector<2x16x16xf32>
    %cst_22 = arith.constant 1.000000e+05 : f32
    %46 = vector.broadcast %cst_22 : f32 to vector<2x16x16xf32>
    %47 = arith.subf %7, %46 : vector<2x16x16xf32>
    %cst_23 = arith.constant 1.800000e-05 : f32
    %48 = vector.broadcast %cst_23 : f32 to vector<2x16x16xf32>
    %49 = arith.mulf %48, %47 : vector<2x16x16xf32>
    %50 = arith.addf %45, %49 : vector<2x16x16xf32>
    %cst_24 = arith.constant 0.000000e+00 : f32
    %51 = vector.broadcast %cst_24 : f32 to vector<2x1x16xf32>
    %52 = vector.extract_strided_slice %22 {offsets = [0, 1, 0], sizes = [2, 15, 16], strides = [1, 1, 1]} : vector<2x16x16xf32> to vector<2x15x16xf32>
    %53 = tpu.concatenate %52, %51 in 1 : vector<2x15x16xf32>, vector<2x1x16xf32> -> vector<2x16x16xf32>
    %cst_25 = arith.constant 0.000000e+00 : f32
    %54 = vector.broadcast %cst_25 : f32 to vector<2x1x16xf32>
    %55 = vector.extract_strided_slice %22 {offsets = [0, 0, 0], sizes = [2, 15, 16], strides = [1, 1, 1]} : vector<2x16x16xf32> to vector<2x15x16xf32>
    %56 = tpu.concatenate %54, %55 in 1 : vector<2x1x16xf32>, vector<2x15x16xf32> -> vector<2x16x16xf32>
    %57 = tpu.iota {dimensions = array<i32: 1>} : vector<2x16x16xi32>
    %58 = arith.subf %53, %56 : vector<2x16x16xf32>
    %cst_26 = arith.constant 5.000000e-01 : f32
    %59 = vector.broadcast %cst_26 : f32 to vector<2x16x16xf32>
    %60 = arith.mulf %59, %58 : vector<2x16x16xf32>
    %c0_i32 = arith.constant 0 : i32
    %61 = vector.broadcast %c0_i32 : i32 to vector<2x16x16xi32>
    %62 = arith.cmpi eq, %57, %61 : vector<2x16x16xi32>
    %63 = arith.subf %53, %22 : vector<2x16x16xf32>
    %c15_i32 = arith.constant 15 : i32
    %64 = vector.broadcast %c15_i32 : i32 to vector<2x16x16xi32>
    %65 = arith.cmpi eq, %57, %64 : vector<2x16x16xi32>
    %66 = arith.subf %22, %56 : vector<2x16x16xf32>
    %67 = arith.select %65, %66, %60 : vector<2x16x16xi1>, vector<2x16x16xf32>
    %68 = arith.select %62, %63, %67 : vector<2x16x16xi1>, vector<2x16x16xf32>
    %cst_27 = arith.constant 0.000000e+00 : f32
    %69 = vector.broadcast %cst_27 : f32 to vector<2x16x1xf32>
    %70 = vector.extract_strided_slice %22 {offsets = [0, 0, 1], sizes = [2, 16, 15], strides = [1, 1, 1]} : vector<2x16x16xf32> to vector<2x16x15xf32>
    %71 = tpu.concatenate %70, %69 in 2 : vector<2x16x15xf32>, vector<2x16x1xf32> -> vector<2x16x16xf32>
    %cst_28 = arith.constant 0.000000e+00 : f32
    %72 = vector.broadcast %cst_28 : f32 to vector<2x16x1xf32>
    %73 = vector.extract_strided_slice %22 {offsets = [0, 0, 0], sizes = [2, 16, 15], strides = [1, 1, 1]} : vector<2x16x16xf32> to vector<2x16x15xf32>
    %74 = tpu.concatenate %72, %73 in 2 : vector<2x16x1xf32>, vector<2x16x15xf32> -> vector<2x16x16xf32>
    %75 = tpu.iota {dimensions = array<i32: 2>} : vector<2x16x16xi32>
    %76 = arith.subf %71, %74 : vector<2x16x16xf32>
    %cst_29 = arith.constant 5.000000e-01 : f32
    %77 = vector.broadcast %cst_29 : f32 to vector<2x16x16xf32>
    %78 = arith.mulf %77, %76 : vector<2x16x16xf32>
    %c0_i32_30 = arith.constant 0 : i32
    %79 = vector.broadcast %c0_i32_30 : i32 to vector<2x16x16xi32>
    %80 = arith.cmpi eq, %75, %79 : vector<2x16x16xi32>
    %81 = arith.subf %71, %22 : vector<2x16x16xf32>
    %c15_i32_31 = arith.constant 15 : i32
    %82 = vector.broadcast %c15_i32_31 : i32 to vector<2x16x16xi32>
    %83 = arith.cmpi eq, %75, %82 : vector<2x16x16xi32>
    %84 = arith.subf %22, %74 : vector<2x16x16xf32>
    %85 = arith.select %83, %84, %78 : vector<2x16x16xi1>, vector<2x16x16xf32>
    %86 = arith.select %80, %81, %85 : vector<2x16x16xi1>, vector<2x16x16xf32>
    %87 = arith.mulf %43, %11 : vector<2x16x16xf32>
    %88 = arith.mulf %87, %50 : vector<2x16x16xf32>
    %cst_32 = arith.constant 1.000000e+00 : f32
    %89 = vector.broadcast %cst_32 : f32 to vector<2x16x16xf32>
    %90 = arith.mulf %89, %68 : vector<2x16x16xf32>
    %cst_33 = arith.constant 2.000000e-01 : f32
    %91 = vector.broadcast %cst_33 : f32 to vector<2x16x16xf32>
    %92 = arith.mulf %90, %91 : vector<2x16x16xf32>
    %93 = arith.subf %88, %92 : vector<2x16x16xf32>
    %94 = arith.mulf %43, %15 : vector<2x16x16xf32>
    %95 = arith.mulf %94, %50 : vector<2x16x16xf32>
    %cst_34 = arith.constant 1.000000e+00 : f32
    %96 = vector.broadcast %cst_34 : f32 to vector<2x16x16xf32>
    %97 = arith.mulf %96, %86 : vector<2x16x16xf32>
    %cst_35 = arith.constant 2.000000e-01 : f32
    %98 = vector.broadcast %cst_35 : f32 to vector<2x16x16xf32>
    %99 = arith.mulf %97, %98 : vector<2x16x16xf32>
    %100 = arith.subf %95, %99 : vector<2x16x16xf32>
    %cst_36 = arith.constant 0.000000e+00 : f32
    %101 = vector.broadcast %cst_36 : f32 to vector<2x1x16xf32>
    %102 = vector.extract_strided_slice %93 {offsets = [0, 1, 0], sizes = [2, 15, 16], strides = [1, 1, 1]} : vector<2x16x16xf32> to vector<2x15x16xf32>
    %103 = tpu.concatenate %102, %101 in 1 : vector<2x15x16xf32>, vector<2x1x16xf32> -> vector<2x16x16xf32>
    %cst_37 = arith.constant 0.000000e+00 : f32
    %104 = vector.broadcast %cst_37 : f32 to vector<2x1x16xf32>
    %105 = vector.extract_strided_slice %93 {offsets = [0, 0, 0], sizes = [2, 15, 16], strides = [1, 1, 1]} : vector<2x16x16xf32> to vector<2x15x16xf32>
    %106 = tpu.concatenate %104, %105 in 1 : vector<2x1x16xf32>, vector<2x15x16xf32> -> vector<2x16x16xf32>
    %107 = tpu.iota {dimensions = array<i32: 1>} : vector<2x16x16xi32>
    %108 = arith.subf %103, %106 : vector<2x16x16xf32>
    %cst_38 = arith.constant 5.000000e-01 : f32
    %109 = vector.broadcast %cst_38 : f32 to vector<2x16x16xf32>
    %110 = arith.mulf %109, %108 : vector<2x16x16xf32>
    %c0_i32_39 = arith.constant 0 : i32
    %111 = vector.broadcast %c0_i32_39 : i32 to vector<2x16x16xi32>
    %112 = arith.cmpi eq, %107, %111 : vector<2x16x16xi32>
    %113 = arith.subf %103, %93 : vector<2x16x16xf32>
    %c15_i32_40 = arith.constant 15 : i32
    %114 = vector.broadcast %c15_i32_40 : i32 to vector<2x16x16xi32>
    %115 = arith.cmpi eq, %107, %114 : vector<2x16x16xi32>
    %116 = arith.subf %93, %106 : vector<2x16x16xf32>
    %117 = arith.select %115, %116, %110 : vector<2x16x16xi1>, vector<2x16x16xf32>
    %118 = arith.select %112, %113, %117 : vector<2x16x16xi1>, vector<2x16x16xf32>
    %cst_41 = arith.constant 2.000000e-01 : f32
    %119 = vector.broadcast %cst_41 : f32 to vector<2x16x16xf32>
    %120 = arith.mulf %118, %119 : vector<2x16x16xf32>
    %cst_42 = arith.constant 0.000000e+00 : f32
    %121 = vector.broadcast %cst_42 : f32 to vector<2x16x1xf32>
    %122 = vector.extract_strided_slice %100 {offsets = [0, 0, 1], sizes = [2, 16, 15], strides = [1, 1, 1]} : vector<2x16x16xf32> to vector<2x16x15xf32>
    %123 = tpu.concatenate %122, %121 in 2 : vector<2x16x15xf32>, vector<2x16x1xf32> -> vector<2x16x16xf32>
    %cst_43 = arith.constant 0.000000e+00 : f32
    %124 = vector.broadcast %cst_43 : f32 to vector<2x16x1xf32>
    %125 = vector.extract_strided_slice %100 {offsets = [0, 0, 0], sizes = [2, 16, 15], strides = [1, 1, 1]} : vector<2x16x16xf32> to vector<2x16x15xf32>
    %126 = tpu.concatenate %124, %125 in 2 : vector<2x16x1xf32>, vector<2x16x15xf32> -> vector<2x16x16xf32>
    %127 = tpu.iota {dimensions = array<i32: 2>} : vector<2x16x16xi32>
    %128 = arith.subf %123, %126 : vector<2x16x16xf32>
    %cst_44 = arith.constant 5.000000e-01 : f32
    %129 = vector.broadcast %cst_44 : f32 to vector<2x16x16xf32>
    %130 = arith.mulf %129, %128 : vector<2x16x16xf32>
    %c0_i32_45 = arith.constant 0 : i32
    %131 = vector.broadcast %c0_i32_45 : i32 to vector<2x16x16xi32>
    %132 = arith.cmpi eq, %127, %131 : vector<2x16x16xi32>
    %133 = arith.subf %123, %100 : vector<2x16x16xf32>
    %c15_i32_46 = arith.constant 15 : i32
    %134 = vector.broadcast %c15_i32_46 : i32 to vector<2x16x16xi32>
    %135 = arith.cmpi eq, %127, %134 : vector<2x16x16xi32>
    %136 = arith.subf %100, %126 : vector<2x16x16xf32>
    %137 = arith.select %135, %136, %130 : vector<2x16x16xi1>, vector<2x16x16xf32>
    %138 = arith.select %132, %133, %137 : vector<2x16x16xi1>, vector<2x16x16xf32>
    %cst_47 = arith.constant 2.000000e-01 : f32
    %139 = vector.broadcast %cst_47 : f32 to vector<2x16x16xf32>
    %140 = arith.mulf %138, %139 : vector<2x16x16xf32>
    %141 = arith.addf %120, %140 : vector<2x16x16xf32>
    %cst_48 = arith.constant 4.032000e-02 : f32
    %142 = vector.broadcast %cst_48 : f32 to vector<2x16x16xf32>
    %143 = arith.mulf %142, %41 : vector<2x16x16xf32>
    %144 = arith.mulf %143, %17 : vector<2x16x16xf32>
    %cst_49 = arith.constant 0.000000e+00 : f32
    %145 = vector.broadcast %cst_49 : f32 to vector<2x16x1xf32>
    %146 = vector.extract_strided_slice %144 {offsets = [0, 0, 1], sizes = [2, 16, 15], strides = [1, 1, 1]} : vector<2x16x16xf32> to vector<2x16x15xf32>
    %147 = tpu.concatenate %146, %145 in 2 : vector<2x16x15xf32>, vector<2x16x1xf32> -> vector<2x16x16xf32>
    %cst_50 = arith.constant 0.000000e+00 : f32
    %148 = vector.broadcast %cst_50 : f32 to vector<2x16x1xf32>
    %149 = vector.extract_strided_slice %144 {offsets = [0, 0, 0], sizes = [2, 16, 15], strides = [1, 1, 1]} : vector<2x16x16xf32> to vector<2x16x15xf32>
    %150 = tpu.concatenate %148, %149 in 2 : vector<2x16x1xf32>, vector<2x16x15xf32> -> vector<2x16x16xf32>
    %151 = arith.subf %147, %150 : vector<2x16x16xf32>
    %cst_51 = arith.constant 0.000000e+00 : f32
    %152 = vector.broadcast %cst_51 : f32 to vector<2x1x16xf32>
    %153 = vector.extract_strided_slice %151 {offsets = [0, 0, 0], sizes = [2, 15, 16], strides = [1, 1, 1]} : vector<2x16x16xf32> to vector<2x15x16xf32>
    %154 = tpu.concatenate %152, %153 in 1 : vector<2x1x16xf32>, vector<2x15x16xf32> -> vector<2x16x16xf32>
    %cst_52 = arith.constant 0.000000e+00 : f32
    %155 = vector.broadcast %cst_52 : f32 to vector<2x1x16xf32>
    %156 = vector.extract_strided_slice %151 {offsets = [0, 1, 0], sizes = [2, 15, 16], strides = [1, 1, 1]} : vector<2x16x16xf32> to vector<2x15x16xf32>
    %157 = tpu.concatenate %156, %155 in 1 : vector<2x15x16xf32>, vector<2x1x16xf32> -> vector<2x16x16xf32>
    %158 = arith.subf %154, %157 : vector<2x16x16xf32>
    %159 = arith.subf %141, %158 : vector<2x16x16xf32>
    %160 = arith.mulf %159, %159 : vector<2x16x16xf32>
    %161 = vector.shape_cast %160 : vector<2x16x16xf32> to vector<1x2x16x16xf32>
    %cst_53 = arith.constant dense<0.000000e+00> : vector<1xf32>
    %162 = vector.multi_reduction <add>, %161, %cst_53 [1, 2, 3] : vector<1x2x16x16xf32> to vector<1xf32>
    %163 = vector.shape_cast %162 : vector<1xf32> to vector<1x1x1x1xf32>
    %164 = vector.extract %163[0, 0, 0, 0] : f32 from vector<1x1x1x1xf32>
    %c0_54 = arith.constant 0 : index
    %c0_55 = arith.constant 0 : index
    %165 = memref.load %arg3[%c0_54, %c0_55] : memref<1x1xf32, #tpu.memory_space<smem>>
    memref.store %164, %arg3[%c0_54, %c0_55] : memref<1x1xf32, #tpu.memory_space<smem>>
    return
  }
  func.func @transform_0(%arg0: i32) -> (i32, i32, i32, i32) {
    %c0_i32 = arith.constant 0 : i32
    %c0_i32_0 = arith.constant 0 : i32
    %c0_i32_1 = arith.constant 0 : i32
    %c0_i32_2 = arith.constant 0 : i32
    return %arg0, %c0_i32, %c0_i32_0, %c0_i32_1 : i32, i32, i32, i32
  }
  func.func @transform_1(%arg0: i32) -> (i32, i32, i32, i32) {
    %c0_i32 = arith.constant 0 : i32
    %c0_i32_0 = arith.constant 0 : i32
    %c0_i32_1 = arith.constant 0 : i32
    %c0_i32_2 = arith.constant 0 : i32
    return %arg0, %c0_i32, %c0_i32_0, %c0_i32_1 : i32, i32, i32, i32
  }
  func.func @transform_2(%arg0: i32) -> (i32, i32) {
    %c0_i32 = arith.constant 0 : i32
    %c0_i32_0 = arith.constant 0 : i32
    return %arg0, %c0_i32 : i32, i32
  }
}

</mosaic_0001>

<llo_original>
// kernel: tpu_custom_call.1
$region0: #{tpu_custom_call.1}
  #allocation0 [shape = 'u32[]', space=smem, size = 0x4, offset = 0x4, fixed_abs, tag = 'smem constant byte address 0x4 - core index']
  #allocation1 [shape = 'u32[144,128]{1,0:T(1,128)}', space=vmem, size = 0x12000, scoped, tag = 'internal scratch']
  %s0 = inlined_call_operand.hbm [shape: f32[2,4,16,16], index: 0, kind: input, shape index: {}]
  %s1 = inlined_call_operand.hbm [shape: f32[2,1,16,16], index: 1, kind: input, shape index: {}]
  %s2 = inlined_call_operand.hbm [shape: f32[1,1], index: 2, kind: output, shape index: {}]
  %s3 = sld [smem:[#allocation0]]
  $region26: #{tpu_custom_call.1} parent=0
    _
  %s5 = ssub.s32 1, %s3
  %s6 = scalar_select 0, %s5, %s3
  $region1: #{tpu_custom_call.1} parent=0
    #allocation2 [shape = 'u8[65536]{0}', space=vmem, size = 0x10000, scoped, tag = 'input window, operand 0, single buffered']
    #allocation3 [shape = 's32[1]{0}', space=sflag, size = 0x4, scoped, tag = 'scoped memory for tpu_custom_call.1']
    #allocation4 [shape = 's32[1]{0}', space=sflag, size = 0x4, scoped, tag = 'scoped memory for tpu_custom_call.1']
    #allocation5 [shape = 'u8[16384]{0}', space=vmem, size = 0x4000, scoped, tag = 'input window, operand 1, single buffered']
    #allocation6 [shape = 's32[1]{0}', space=sflag, size = 0x4, scoped, tag = 'scoped memory for tpu_custom_call.1']
    #allocation7 [shape = 'u8[512]{0}', space=smem, size = 0x200, scoped, tag = 'output window, operand 0, single buffered']
    %7 = vsyncpa [#allocation3], 0
    %8 = vsyncpa [#allocation6], 0
    %9 = vsyncpa [#allocation4], 0
    // Predicated region
    $region2: #{tpu_custom_call.1} parent=1 // pred_check
      _
    $region3: #{tpu_custom_call.1} parent=1 // pred_check_branch
      %11 = sbr.rel (0) target = $region5
    $region4: #{tpu_custom_call.1} parent=1 // pred_region
      %s13 = ssub.s32 2048, 2048
      %14 = vsyncadd [#allocation3], %s13
      %s15 = sshll.u32 [#allocation2], 4
      %s16 = int_to_ptr.vmem [resolvable:$true] %s15
      %21 = dma.hbm_to_vmem [thread:$0]  %s0, 2048, %s16, [#allocation3], 128, 128, 8
    $region5: #{tpu_custom_call.1} parent=1 // pred_fallthru
      _
    // Predicated region
    $region6: #{tpu_custom_call.1} parent=1 // pred_check
      _
    $region7: #{tpu_custom_call.1} parent=1 // pred_check_branch
      %23 = sbr.rel (0) target = $region9
    $region8: #{tpu_custom_call.1} parent=1 // pred_region
      %s25 = ssub.s32 512, 512
      %26 = vsyncadd [#allocation6], %s25
      %s27 = sshll.u32 [#allocation5], 4
      %s28 = int_to_ptr.vmem [resolvable:$true] %s27
      %33 = dma.hbm_to_vmem [thread:$0]  %s1, 512, %s28, [#allocation6], 128, 128, 8
    $region9: #{tpu_custom_call.1} parent=1 // pred_fallthru
      _
    // Predicated region
    $region10: #{tpu_custom_call.1} parent=1 // pred_check
      _
    $region11: #{tpu_custom_call.1} parent=1 // pred_check_branch
      %35 = sbr.rel (0) target = $region13
    $region12: #{tpu_custom_call.1} parent=1 // pred_region
      %36 = dma.done [#allocation3], 2048
    $region13: #{tpu_custom_call.1} parent=1 // pred_fallthru
      _
    // Predicated region
    $region14: #{tpu_custom_call.1} parent=1 // pred_check
      _
    $region15: #{tpu_custom_call.1} parent=1 // pred_check_branch
      %38 = sbr.rel (0) target = $region17
    $region16: #{tpu_custom_call.1} parent=1 // pred_region
      %39 = dma.done [#allocation6], 512
    $region17: #{tpu_custom_call.1} parent=1 // pred_fallthru
      _
    %v40 = vld [vmem:[#allocation2] sm:$0xff]
    %v41 = vld [vmem:[#allocation2 + $0x8] sm:$0xff]
    %v42 = vld [vmem:[#allocation2 + $0x10] sm:$0xff]
    %v43 = vld [vmem:[#allocation2 + $0x18] sm:$0xff]
    %v44 = vld [vmem:[#allocation2 + $0x20] sm:$0xff]
    %v45 = vld [vmem:[#allocation2 + $0x28] sm:$0xff]
    %v46 = vld [vmem:[#allocation2 + $0x30] sm:$0xff]
    %v47 = vld [vmem:[#allocation2 + $0x38] sm:$0xff]
    %v48 = vld [vmem:[#allocation2 + $0x40] sm:$0xff]
    %v49 = vld [vmem:[#allocation2 + $0x48] sm:$0xff]
    %v50 = vld [vmem:[#allocation2 + $0x50] sm:$0xff]
    %v51 = vld [vmem:[#allocation2 + $0x58] sm:$0xff]
    %v52 = vld [vmem:[#allocation2 + $0x60] sm:$0xff]
    %v53 = vld [vmem:[#allocation2 + $0x68] sm:$0xff]
    %v54 = vld [vmem:[#allocation2 + $0x70] sm:$0xff]
    %v55 = vld [vmem:[#allocation2 + $0x78] sm:$0xff]
    %v56 = vld [vmem:[#allocation5] sm:$0xff]
    %v57 = vld [vmem:[#allocation5 + $0x8] sm:$0xff]
    %v58 = vld [vmem:[#allocation5 + $0x10] sm:$0xff]
    %v59 = vld [vmem:[#allocation5 + $0x18] sm:$0xff]
    %v60 = vmul.f32 %v40, 100000.0
    %v61 = vmul.f32 %v41, 100000.0
    %v62 = vmul.f32 %v48, 100000.0
    %v63 = vmul.f32 %v49, 100000.0
    %v64 = vadd.f32 %v60, 900000.0
    %v65 = vadd.f32 %v61, 900000.0
    %v66 = vadd.f32 %v62, 900000.0
    %v67 = vadd.f32 %v63, 900000.0
    %v68 = vmul.f32 %v42, 0.001
    %v69 = vmul.f32 %v43, 0.001
    %v70 = vmul.f32 %v50, 0.001
    %v71 = vmul.f32 %v51, 0.001
    %v72 = vmul.f32 %v44, 0.001
    %v73 = vmul.f32 %v45, 0.001
    %v74 = vmul.f32 %v52, 0.001
    %v75 = vmul.f32 %v53, 0.001
    %v76 = vmul.f32 %v56, 5.0
    %v77 = vmul.f32 %v57, 5.0
    %v78 = vmul.f32 %v58, 5.0
    %v79 = vmul.f32 %v59, 5.0
    %v80 = vadd.f32 %v76, 12.0
    %v81 = vadd.f32 %v77, 12.0
    %v82 = vadd.f32 %v78, 12.0
    %v83 = vadd.f32 %v79, 12.0
    %v84 = vsub.f32 %v80, 20.0
    %v85 = vsub.f32 %v81, 20.0
    %v86 = vsub.f32 %v82, 20.0
    %v87 = vsub.f32 %v83, 20.0
    %v88 = vmul.f32 %v84, 0.00021
    %v89 = vmul.f32 %v85, 0.00021
    %v90 = vmul.f32 %v86, 0.00021
    %v91 = vmul.f32 %v87, 0.00021
    %v92 = vsub.f32 1.0, %v88
    %v93 = vsub.f32 1.0, %v89
    %v94 = vsub.f32 1.0, %v90
    %v95 = vsub.f32 1.0, %v91
    %v96 = vmul.f32 %v84, 3e-06
    %v97 = vmul.f32 %v85, 3e-06
    %v98 = vmul.f32 %v86, 3e-06
    %v99 = vmul.f32 %v87, 3e-06
    %v100 = vmul.f32 %v96, %v84
    %v101 = vmul.f32 %v97, %v85
    %v102 = vmul.f32 %v98, %v86
    %v103 = vmul.f32 %v99, %v87
    %v104 = vsub.f32 %v92, %v100
    %v105 = vsub.f32 %v93, %v101
    %v106 = vsub.f32 %v94, %v102
    %v107 = vsub.f32 %v95, %v103
    %v108 = vmul.f32 %v104, 1000.0
    %v109 = vmul.f32 %v105, 1000.0
    %v110 = vmul.f32 %v106, 1000.0
    %v111 = vmul.f32 %v107, 1000.0
    %v112 = vsub.f32 %v64, 100000.0
    %v113 = vsub.f32 %v65, 100000.0
    %v114 = vsub.f32 %v66, 100000.0
    %v115 = vsub.f32 %v67, 100000.0
    %v116 = vmul.f32 %v112, 4.6e-10
    %v117 = vmul.f32 %v113, 4.6e-10
    %v118 = vmul.f32 %v114, 4.6e-10
    %v119 = vmul.f32 %v115, 4.6e-10
    %v120 = vadd.f32 %v116, 1.0
    %v121 = vadd.f32 %v117, 1.0
    %v122 = vadd.f32 %v118, 1.0
    %v123 = vadd.f32 %v119, 1.0
    %v124 = vmul.f32 %v108, %v120
    %v125 = vmul.f32 %v109, %v121
    %v126 = vmul.f32 %v110, %v122
    %v127 = vmul.f32 %v111, %v123
    %v128 = vmul.f32 %v124, 55.509296
    %v129 = vmul.f32 %v125, 55.509296
    %v130 = vmul.f32 %v126, 55.509296
    %v131 = vmul.f32 %v127, 55.509296
    %v132 = vmul.f32 %v80, 75.4
    %v133 = vmul.f32 %v81, 75.4
    %v134 = vmul.f32 %v82, 75.4
    %v135 = vmul.f32 %v83, 75.4
    %v136 = vmul.f32 %v112, 1.8e-05
    %v137 = vmul.f32 %v113, 1.8e-05
    %v138 = vmul.f32 %v114, 1.8e-05
    %v139 = vmul.f32 %v115, 1.8e-05
    %v140 = vadd.f32 %v132, %v136
    %v141 = vadd.f32 %v133, %v137
    %v142 = vadd.f32 %v134, %v138
    %v143 = vadd.f32 %v135, %v139
    %vm148 = vcmask 1046528
    %v149 = vrot.slane %v80, 1
    %v150 = vrot.slane %v81, 1
    %v151 = vsel %vm148, %v149, %v150
    %v152 = vrot.slane %v82, 1
    %v153 = vrot.slane %v83, 1
    %v154 = vsel %vm148, %v152, %v153
    %v159 = vsel %vm148, %v150, 0.0
    %v160 = vsel %vm148, %v153, 0.0
    %vm161 = vcmask 1040384
    %v162 = vrot.slane %v80, 7
    %v163 = vrot.slane %v81, 7
    %v164 = vsel %vm161, %v162, %v163
    %v165 = vrot.slane %v82, 7
    %v166 = vrot.slane %v83, 7
    %v167 = vsel %vm161, %v165, %v166
    %v172 = vsel %vm161, 0.0, %v162
    %v173 = vsel %vm161, 0.0, %v165
    %v174 = vlaneseq
    %v175 = vshrl.u32 %v174, 7
    %v176 = vadd.s32 %v175, 8
    %v177 = vsub.f32 %v151, %v172
    %v178 = vsub.f32 %v159, %v164
    %v179 = vsub.f32 %v154, %v173
    %v180 = vsub.f32 %v160, %v167
    %v181 = vmul.f32 %v177, 0.5
    %v182 = vmul.f32 %v178, 0.5
    %v183 = vmul.f32 %v179, 0.5
    %v184 = vmul.f32 %v180, 0.5
    %vm185 = vcmp.eq.s32.totalorder %v175, 0
    %vm186 = vcmp.eq.s32.totalorder %v176, 0
    %v187 = vsub.f32 %v151, %v80
    %v188 = vsub.f32 %v159, %v81
    %v189 = vsub.f32 %v154, %v82
    %v190 = vsub.f32 %v160, %v83
    %vm191 = vcmp.eq.s32.totalorder %v175, 15
    %vm192 = vcmp.eq.s32.totalorder %v176, 15
    %v193 = vsub.f32 %v80, %v172
    %v194 = vsub.f32 %v81, %v164
    %v195 = vsub.f32 %v82, %v173
    %v196 = vsub.f32 %v83, %v167
    %v197 = vsel %vm191, %v193, %v181
    %v198 = vsel %vm192, %v194, %v182
    %v199 = vsel %vm191, %v195, %v183
    %v200 = vsel %vm192, %v196, %v184
    %v201 = vsel %vm185, %v187, %v197
    %v202 = vsel %vm186, %v188, %v198
    %v203 = vsel %vm185, %v189, %v199
    %v204 = vsel %vm186, %v190, %v200
    %205 = vrot.lane.b32.xlu0 %v80, 127
    %v206 = vpop.permute.xlu0 %205
    %207 = vrot.lane.b32.xlu0 %v81, 127
    %v208 = vpop.permute.xlu0 %207
    %209 = vrot.lane.b32.xlu0 %v82, 127
    %v210 = vpop.permute.xlu0 %209
    %211 = vrot.lane.b32.xlu0 %v83, 127
    %v212 = vpop.permute.xlu0 %211
    %vm217 = vcmask 121856
    %v218 = vsel %vm217, %v206, 0.0
    %v219 = vsel %vm217, %v208, 0.0
    %v220 = vsel %vm217, %v210, 0.0
    %v221 = vsel %vm217, %v212, 0.0
    %222 = vrot.lane.b32.xlu0 %v80, 1
    %v223 = vpop.permute.xlu0 %222
    %224 = vrot.lane.b32.xlu0 %v81, 1
    %v225 = vpop.permute.xlu0 %224
    %226 = vrot.lane.b32.xlu0 %v82, 1
    %v227 = vpop.permute.xlu0 %226
    %228 = vrot.lane.b32.xlu0 %v83, 1
    %v229 = vpop.permute.xlu0 %228
    %vm234 = vcmask 7168
    %v235 = vsel %vm234, 0.0, %v223
    %v236 = vsel %vm234, 0.0, %v225
    %v237 = vsel %vm234, 0.0, %v227
    %v238 = vsel %vm234, 0.0, %v229
    %v239 = vlaneseq
    %v240 = vand.u32 %v239, 127
    %v241 = vsub.f32 %v218, %v235
    %v242 = vsub.f32 %v219, %v236
    %v243 = vsub.f32 %v220, %v237
    %v244 = vsub.f32 %v221, %v238
    %v245 = vmul.f32 %v241, 0.5
    %v246 = vmul.f32 %v242, 0.5
    %v247 = vmul.f32 %v243, 0.5
    %v248 = vmul.f32 %v244, 0.5
    %vm249 = vcmp.eq.s32.totalorder %v240, 0
    %v250 = vsub.f32 %v218, %v80
    %v251 = vsub.f32 %v219, %v81
    %v252 = vsub.f32 %v220, %v82
    %v253 = vsub.f32 %v221, %v83
    %vm254 = vcmp.eq.s32.totalorder %v240, 15
    %v255 = vsub.f32 %v80, %v235
    %v256 = vsub.f32 %v81, %v236
    %v257 = vsub.f32 %v82, %v237
    %v258 = vsub.f32 %v83, %v238
    %v259 = vsel %vm254, %v255, %v245
    %v260 = vsel %vm254, %v256, %v246
    %v261 = vsel %vm254, %v257, %v247
    %v262 = vsel %vm254, %v258, %v248
    %v263 = vsel %vm249, %v250, %v259
    %v264 = vsel %vm249, %v251, %v260
    %v265 = vsel %vm249, %v252, %v261
    %v266 = vsel %vm249, %v253, %v262
    %v267 = vmul.f32 %v128, %v68
    %v268 = vmul.f32 %v129, %v69
    %v269 = vmul.f32 %v130, %v70
    %v270 = vmul.f32 %v131, %v71
    %v271 = vmul.f32 %v267, %v140
    %v272 = vmul.f32 %v268, %v141
    %v273 = vmul.f32 %v269, %v142
    %v274 = vmul.f32 %v270, %v143
    %v275 = vmul.f32 %v201, 0.2
    %v276 = vmul.f32 %v202, 0.2
    %v277 = vmul.f32 %v203, 0.2
    %v278 = vmul.f32 %v204, 0.2
    %v279 = vsub.f32 %v271, %v275
    %v280 = vsub.f32 %v272, %v276
    %v281 = vsub.f32 %v273, %v277
    %v282 = vsub.f32 %v274, %v278
    %v283 = vmul.f32 %v128, %v72
    %v284 = vmul.f32 %v129, %v73
    %v285 = vmul.f32 %v130, %v74
    %v286 = vmul.f32 %v131, %v75
    %v287 = vmul.f32 %v283, %v140
    %v288 = vmul.f32 %v284, %v141
    %v289 = vmul.f32 %v285, %v142
    %v290 = vmul.f32 %v286, %v143
    %v291 = vmul.f32 %v263, 0.2
    %v292 = vmul.f32 %v264, 0.2
    %v293 = vmul.f32 %v265, 0.2
    %v294 = vmul.f32 %v266, 0.2
    %v295 = vsub.f32 %v287, %v291
    %v296 = vsub.f32 %v288, %v292
    %v297 = vsub.f32 %v289, %v293
    %v298 = vsub.f32 %v290, %v294
    %v303 = vrot.slane %v279, 1
    %v304 = vrot.slane %v280, 1
    %v305 = vsel %vm148, %v303, %v304
    %v306 = vrot.slane %v281, 1
    %v307 = vrot.slane %v282, 1
    %v308 = vsel %vm148, %v306, %v307
    %v313 = vsel %vm148, %v304, 0.0
    %v314 = vsel %vm148, %v307, 0.0
    %v315 = vrot.slane %v279, 7
    %v316 = vrot.slane %v280, 7
    %v317 = vsel %vm161, %v315, %v316
    %v318 = vrot.slane %v281, 7
    %v319 = vrot.slane %v282, 7
    %v320 = vsel %vm161, %v318, %v319
    %v325 = vsel %vm161, 0.0, %v315
    %v326 = vsel %vm161, 0.0, %v318
    %v327 = vsub.f32 %v305, %v325
    %v328 = vsub.f32 %v313, %v317
    %v329 = vsub.f32 %v308, %v326
    %v330 = vsub.f32 %v314, %v320
    %v331 = vmul.f32 %v327, 0.5
    %v332 = vmul.f32 %v328, 0.5
    %v333 = vmul.f32 %v329, 0.5
    %v334 = vmul.f32 %v330, 0.5
    %v335 = vsub.f32 %v305, %v279
    %v336 = vsub.f32 %v313, %v280
    %v337 = vsub.f32 %v308, %v281
    %v338 = vsub.f32 %v314, %v282
    %v339 = vsub.f32 %v279, %v325
    %v340 = vsub.f32 %v280, %v317
    %v341 = vsub.f32 %v281, %v326
    %v342 = vsub.f32 %v282, %v320
    %v343 = vsel %vm191, %v339, %v331
    %v344 = vsel %vm192, %v340, %v332
    %v345 = vsel %vm191, %v341, %v333
    %v346 = vsel %vm192, %v342, %v334
    %v347 = vsel %vm185, %v335, %v343
    %v348 = vsel %vm186, %v336, %v344
    %v349 = vsel %vm185, %v337, %v345
    %v350 = vsel %vm186, %v338, %v346
    %v351 = vmul.f32 %v347, 0.2
    %v352 = vmul.f32 %v348, 0.2
    %v353 = vmul.f32 %v349, 0.2
    %v354 = vmul.f32 %v350, 0.2
    %359 = vrot.lane.b32.xlu0 %v295, 127
    %v360 = vpop.permute.xlu0 %359
    %361 = vrot.lane.b32.xlu0 %v296, 127
    %v362 = vpop.permute.xlu0 %361
    %363 = vrot.lane.b32.xlu0 %v297, 127
    %v364 = vpop.permute.xlu0 %363
    %365 = vrot.lane.b32.xlu0 %v298, 127
    %v366 = vpop.permute.xlu0 %365
    %v371 = vsel %vm217, %v360, 0.0
    %v372 = vsel %vm217, %v362, 0.0
    %v373 = vsel %vm217, %v364, 0.0
    %v374 = vsel %vm217, %v366, 0.0
    %375 = vrot.lane.b32.xlu0 %v295, 1
    %v376 = vpop.permute.xlu0 %375
    %377 = vrot.lane.b32.xlu0 %v296, 1
    %v378 = vpop.permute.xlu0 %377
    %379 = vrot.lane.b32.xlu0 %v297, 1
    %v380 = vpop.permute.xlu0 %379
    %381 = vrot.lane.b32.xlu0 %v298, 1
    %v382 = vpop.permute.xlu0 %381
    %v387 = vsel %vm234, 0.0, %v376
    %v388 = vsel %vm234, 0.0, %v378
    %v389 = vsel %vm234, 0.0, %v380
    %v390 = vsel %vm234, 0.0, %v382
    %v391 = vsub.f32 %v371, %v387
    %v392 = vsub.f32 %v372, %v388
    %v393 = vsub.f32 %v373, %v389
    %v394 = vsub.f32 %v374, %v390
    %v395 = vmul.f32 %v391, 0.5
    %v396 = vmul.f32 %v392, 0.5
    %v397 = vmul.f32 %v393, 0.5
    %v398 = vmul.f32 %v394, 0.5
    %v399 = vsub.f32 %v371, %v295
    %v400 = vsub.f32 %v372, %v296
    %v401 = vsub.f32 %v373, %v297
    %v402 = vsub.f32 %v374, %v298
    %v403 = vsub.f32 %v295, %v387
    %v404 = vsub.f32 %v296, %v388
    %v405 = vsub.f32 %v297, %v389
    %v406 = vsub.f32 %v298, %v390
    %v407 = vsel %vm254, %v403, %v395
    %v408 = vsel %vm254, %v404, %v396
    %v409 = vsel %vm254, %v405, %v397
    %v410 = vsel %vm254, %v406, %v398
    %v411 = vsel %vm249, %v399, %v407
    %v412 = vsel %vm249, %v400, %v408
    %v413 = vsel %vm249, %v401, %v409
    %v414 = vsel %vm249, %v402, %v410
    %v415 = vmul.f32 %v411, 0.2
    %v416 = vmul.f32 %v412, 0.2
    %v417 = vmul.f32 %v413, 0.2
    %v418 = vmul.f32 %v414, 0.2
    %v419 = vadd.f32 %v351, %v415
    %v420 = vadd.f32 %v352, %v416
    %v421 = vadd.f32 %v353, %v417
    %v422 = vadd.f32 %v354, %v418
    %v423 = vmul.f32 %v124, 0.04032
    %v424 = vmul.f32 %v125, 0.04032
    %v425 = vmul.f32 %v126, 0.04032
    %v426 = vmul.f32 %v127, 0.04032
    %v427 = vmul.f32 %v423, %v46
    %v428 = vmul.f32 %v424, %v47
    %v429 = vmul.f32 %v425, %v54
    %v430 = vmul.f32 %v426, %v55
    %435 = vrot.lane.b32.xlu0 %v427, 127
    %v436 = vpop.permute.xlu0 %435
    %437 = vrot.lane.b32.xlu0 %v428, 127
    %v438 = vpop.permute.xlu0 %437
    %439 = vrot.lane.b32.xlu0 %v429, 127
    %v440 = vpop.permute.xlu0 %439
    %441 = vrot.lane.b32.xlu0 %v430, 127
    %v442 = vpop.permute.xlu0 %441
    %v447 = vsel %vm217, %v436, 0.0
    %v448 = vsel %vm217, %v438, 0.0
    %v449 = vsel %vm217, %v440, 0.0
    %v450 = vsel %vm217, %v442, 0.0
    %451 = vrot.lane.b32.xlu0 %v427, 1
    %v452 = vpop.permute.xlu0 %451
    %453 = vrot.lane.b32.xlu0 %v428, 1
    %v454 = vpop.permute.xlu0 %453
    %455 = vrot.lane.b32.xlu0 %v429, 1
    %v456 = vpop.permute.xlu0 %455
    %457 = vrot.lane.b32.xlu0 %v430, 1
    %v458 = vpop.permute.xlu0 %457
    %v463 = vsel %vm234, 0.0, %v452
    %v464 = vsel %vm234, 0.0, %v454
    %v465 = vsel %vm234, 0.0, %v456
    %v466 = vsel %vm234, 0.0, %v458
    %v467 = vsub.f32 %v447, %v463
    %v468 = vsub.f32 %v448, %v464
    %v469 = vsub.f32 %v449, %v465
    %v470 = vsub.f32 %v450, %v466
    %v475 = vrot.slane %v467, 7
    %v476 = vrot.slane %v468, 7
    %v477 = vsel %vm161, %v475, %v476
    %v478 = vrot.slane %v469, 7
    %v479 = vrot.slane %v470, 7
    %v480 = vsel %vm161, %v478, %v479
    %v485 = vsel %vm161, 0.0, %v475
    %v486 = vsel %vm161, 0.0, %v478
    %v487 = vrot.slane %v467, 1
    %v488 = vrot.slane %v468, 1
    %v489 = vsel %vm148, %v487, %v488
    %v490 = vrot.slane %v469, 1
    %v491 = vrot.slane %v470, 1
    %v492 = vsel %vm148, %v490, %v491
    %v497 = vsel %vm148, %v488, 0.0
    %v498 = vsel %vm148, %v491, 0.0
    %v499 = vsub.f32 %v485, %v489
    %v500 = vsub.f32 %v477, %v497
    %v501 = vsub.f32 %v486, %v492
    %v502 = vsub.f32 %v480, %v498
    %v503 = vsub.f32 %v419, %v499
    %v504 = vsub.f32 %v420, %v500
    %v505 = vsub.f32 %v421, %v501
    %v506 = vsub.f32 %v422, %v502
    %v507 = vmul.f32 %v503, %v503
    %v508 = vmul.f32 %v504, %v504
    %v509 = vmul.f32 %v505, %v505
    %v510 = vmul.f32 %v506, %v506
    %vm511 = vcmask 130048
    %v512 = vsel %vm511, %v507, 0.0
    %v513 = vsel %vm511, %v508, 0.0
    %v514 = vadd.f32 %v512, %v513
    %v515 = vsel %vm511, %v509, 0.0
    %v516 = vadd.f32 %v514, %v515
    %v517 = vsel %vm511, %v510, 0.0
    %v518 = vadd.f32 %v516, %v517
    %519 = vadd.xlane.f32.xlu0 %v518
    %v520 = vpop.xlane.xlu0 %519
    %v521 = vrot.slane %v520, 4
    %v522 = vadd.f32 %v520, %v521
    %v523 = vrot.slane %v522, 2
    %v524 = vadd.f32 %v522, %v523
    %v525 = vrot.slane %v524, 1
    %v526 = vadd.f32 %v524, %v525
    %s527 = vtos %v526
    %s528 = scalar_lea.smem [#allocation7], 0
    %529 = sst [smem:[%s528]] %s527
    // Predicated region
    $region18: #{tpu_custom_call.1} parent=1 // pred_check
      _
    $region19: #{tpu_custom_call.1} parent=1 // pred_check_branch
      %531 = sbr.rel (0) target = $region21
    $region20: #{tpu_custom_call.1} parent=1 // pred_region
      %s533 = ssub.s32 16, 16
      %534 = vsyncadd [#allocation4], %s533
      %537 = dma.smem_to_hbm [#allocation7], 16, %s2, [#allocation4]
    $region21: #{tpu_custom_call.1} parent=1 // pred_fallthru
      _
    // Predicated region
    $region22: #{tpu_custom_call.1} parent=1 // pred_check
      _
    $region23: #{tpu_custom_call.1} parent=1 // pred_check_branch
      %539 = sbr.rel (0) target = $region25
    $region24: #{tpu_custom_call.1} parent=1 // pred_region
      %540 = dma.done [#allocation4], 16
    $region25: #{tpu_custom_call.1} parent=1 // pred_fallthru
      _
    %541 = sfence
    %542 = vsyncpa [#allocation3], 1
    %543 = vsyncpa [#allocation6], 1
    %544 = vsyncpa [#allocation4], 1

</llo_original>
